<compile_context>
chip_gen: v6e
topology: v6e:2x2x1
jax: 0.10.0
libtpu: 0.0.40
codegen_flags: <defaults>
</compile_context>

<pallas_src>
import functools

import jax
import jax.numpy as jnp
from jax.experimental import pallas as pl
from jax.experimental.pallas import tpu as pltpu

SQRT3 = 1.7320508075688772
SQRT5 = 2.23606797749979


# --------------------------- generation-aware limits --------------------------

def _tpu_vmem_capacity_bytes():
    try:
        return int(pltpu.get_tpu_info().vmem_capacity_bytes)
    except Exception:
        return 64 * 1024 * 1024            # conservative (v7x-sized) fallback


_VMEM_CAPACITY = _tpu_vmem_capacity_bytes()
_VMEM_LIMIT = min((_VMEM_CAPACITY * 3) // 4, 100 * 1024 * 1024)
_BIG_VMEM = _VMEM_CAPACITY >= 100 * 1024 * 1024      # 128-MiB v5e/v6e parts
_ROW_TILE_CAP = 512 if _BIG_VMEM else 256
_TEST_TILE_CAP = 1024 if _BIG_VMEM else 512


# ----------------------------- covariance math -------------------------------

def _cov_block(x1_col, x2_row, cov):
    """k(|x1/l - x2/l|) for pre-scaled inputs; (n,1) x (1,m) -> (n,m)."""
    diff = x1_col - x2_row
    if cov == 'se':
        return jnp.exp(-0.5 * diff * diff)            # abs not needed (squared)
    d = jnp.abs(diff)
    if cov == 'exp':
        return jnp.exp(-d)
    if cov == 'mat1.5':
        return (1.0 + SQRT3 * d) * jnp.exp(-SQRT3 * d)
    if cov == 'mat2.5':
        return (1.0 + SQRT5 * d + (5.0 / 3.0) * d * d) * jnp.exp(-SQRT5 * d)
    raise NotImplementedError(f"'{cov}' covariance function not recognised")


# ------------------------------ Pallas kernels --------------------------------

def _cov_matrix_kernel(x1_ref, x2_ref, out_ref, *, cov):
    """One row-tile of the covariance matrix (no jitter: done in the wrapper)."""
    out_ref[...] = _cov_block(x1_ref[...], x2_ref[...], cov)


def _posterior_kernel(xt_col_ref, xt_row_ref, x_row_ref, b_ref, b_col_ref,
                      y_ref, mu_ref, cov_ref, *, cov):
    """Fused GP posterior for one tile of test rows (everything in VMEM).

        mu[blk]    = y (1,n) @ B[:, blk]                         (1, tile)
        K_tn_blk   = k(x_test[blk], X)                           (tile, n)
        covar[blk] = k(x_test[blk], x_test) - K_tn_blk @ B       (tile, t)

    B = K_nn^{-1} K_nt is computed once in the wrapper via cho_solve, so there
    is no (n,n) inverse and no per-step scratch initialization; the grid axis
    is fully parallel.
    """
    xt_blk = xt_col_ref[...]                                          # (tile, 1)

    # mu row tile: K-major (1,n) x (n,tile), lane-dense output, no transpose.
    mu_ref[...] = jnp.dot(y_ref[...], b_col_ref[...],
                          preferred_element_type=jnp.float32)

    k_tn = _cov_block(xt_blk, x_row_ref[...], cov)                    # (tile, n)
    kb = jnp.dot(k_tn, b_ref[...], preferred_element_type=jnp.float32)  # (tile, t)

    # k_tt computed last so the (tile, t) temporary has a short live range.
    k_tt = _cov_block(xt_blk, xt_row_ref[...], cov)                   # (tile, t)
    cov_ref[...] = k_tt - kb


# ------------------------------ tiling helpers --------------------------------

def _row_tile(n, cap=_ROW_TILE_CAP):
    """Largest multiple-of-8 tile <= cap that divides n; else full n."""
    if n <= cap:
        return n
    for tm in range(cap, 7, -8):
        if n % tm == 0:
            return tm
    return n   # TODO(synk): no multiple-of-8 divisor -> single block; pad upstream for huge prime n


def _test_tile(t, cap=_TEST_TILE_CAP):
    """Row tile for the fused posterior kernel (multiple of 128 so the mu row
    block stays lane-aligned); else full t."""
    if t <= cap:
        return t
    for tt in range(cap, 127, -128):
        if t % tt == 0:
            return tt
    return t   # TODO(synk): same fallback caveat as _row_tile


# ------------------------------ Pallas wrappers --------------------------------

def covariance_matrix(x1, x2, cov='se', l=1.0, row_tile=None):
    """K[i,j] = k(|x1[i]-x2[j]| / l).  (Jitter is added by the callers.)"""
    n, m = x1.shape[0], x2.shape[0]
    inv_l = 1.0 / jnp.asarray(l, jnp.float32)
    x1s = (x1.astype(jnp.float32) * inv_l).reshape(n, 1)
    x2s = (x2.astype(jnp.float32) * inv_l).reshape(1, m)

    tm = row_tile if row_tile is not None else _row_tile(n)
    return pl.pallas_call(
        functools.partial(_cov_matrix_kernel, cov=cov),
        out_shape=jax.ShapeDtypeStruct((n, m), jnp.float32),
        grid=(n // tm,),
        in_specs=[
            pl.BlockSpec((tm, 1), lambda i: (i, 0)),    # x1 column tile
            pl.BlockSpec((1, m), lambda i: (0, 0)),     # x2 row (full)
        ],
        out_specs=pl.BlockSpec((tm, m), lambda i: (i, 0)),
        compiler_params=pltpu.CompilerParams(
            dimension_semantics=("parallel",),
            vmem_limit_bytes=_VMEM_LIMIT),
    )(x1s, x2s)


# ------------------------------- GP semantics ----------------------------------

def gp_prior(x_test, cov='se', l=1.0):
    t = x_test.shape[0]
    K = covariance_matrix(x_test, x_test, cov=cov, l=l)
    d = jnp.arange(t)
    K = K.at[d, d].add(jnp.float32(1e-8))              # O(t) diag update in XLA
    return jnp.zeros_like(x_test), K                    # (loc, covariance_matrix)


def gp_posterior(X, y, x_test, cov='se', sigma_y=0.0, l=1.0,
                 observation_noise=False, test_tile=None):
    n, t = X.shape[0], x_test.shape[0]
    sigma_y = jnp.asarray(sigma_y, jnp.float32)
    inv_l = 1.0 / jnp.asarray(l, jnp.float32)

    # K_nn (Pallas) + (sigma_y^2 + 1e-8) on the diagonal (O(n) XLA update).
    K_nn = covariance_matrix(X, X, cov=cov, l=l)
    dn = jnp.arange(n)
    K_nn = K_nn.at[dn, dn].add(sigma_y ** 2 + 1e-8)

    # TODO(synk): Cholesky + triangular solves stay in jnp/jax.scipy
    # (sequential dependency, no clean Pallas TPU mapping).
    chol = jnp.linalg.cholesky(K_nn)

    # K_nt from the Pallas covariance kernel; B = K_nn^{-1} K_nt via cho_solve.
    # No explicit inverse, no (n,n) operand in the posterior kernel's VMEM.
    K_nt = covariance_matrix(X, x_test, cov=cov, l=l)                 # (n, t)
    B = jax.scipy.linalg.cho_solve((chol, True), K_nt)                # (n, t)

    Xs = X.astype(jnp.float32) * inv_l
    xts = x_test.astype(jnp.float32) * inv_l
    y_row = y.astype(jnp.float32).reshape(1, n)

    tile = test_tile if test_tile is not None else _test_tile(t)
    mu_row, covar = pl.pallas_call(
        functools.partial(_posterior_kernel, cov=cov),
        out_shape=(jax.ShapeDtypeStruct((1, t), jnp.float32),
                   jax.ShapeDtypeStruct((t, t), jnp.float32)),
        grid=(t // tile,),
        in_specs=[
            pl.BlockSpec((tile, 1), lambda i: (i, 0)),   # x_test column tile
            pl.BlockSpec((1, t), lambda i: (0, 0)),      # x_test row (full)
            pl.BlockSpec((1, n), lambda i: (0, 0)),      # X row (full)
            pl.BlockSpec((n, t), lambda i: (0, 0)),      # B (grid-invariant)
            pl.BlockSpec((n, tile), lambda i: (0, i)),   # B column tile (mu path)
            pl.BlockSpec((1, n), lambda i: (0, 0)),      # y row (full)
        ],
        out_specs=(pl.BlockSpec((1, tile), lambda i: (0, i)),   # mu row tiles
                   pl.BlockSpec((tile, t), lambda i: (i, 0))),  # covar row tiles
        compiler_params=pltpu.CompilerParams(
            dimension_semantics=("parallel",),          # no scratch: megacore-safe
            vmem_limit_bytes=_VMEM_LIMIT),
    )(xts.reshape(t, 1), xts.reshape(1, t), Xs.reshape(1, n), B, B, y_row)

    # K_tt diagonal jitter (+ observation noise) as an O(t) XLA update.
    tt_jitter = jnp.asarray(1e-8, jnp.float32)
    if observation_noise:
        tt_jitter = tt_jitter + sigma_y ** 2
    dt = jnp.arange(t)
    covar = covar.at[dt, dt].add(tt_jitter)

    return mu_row.reshape(t), covar                     # (loc, covariance_matrix)


class GP:
    def __init__(self, sigma_y: float = 0.0, learn_sigma_y: bool = False,
                 l: float = 1.0, learn_l: bool = False):
        self.log_sigma_y = jnp.log(jnp.abs(jnp.asarray(sigma_y, jnp.float32)))
        self.log_l = jnp.log(jnp.abs(jnp.asarray(l, jnp.float32)))

    @property
    def sigma_y(self):
        return jnp.exp(self.log_sigma_y)

    @property
    def l(self):
        return jnp.exp(self.log_l)

    def __call__(self, x_test, X=None, y=None, cov='se',
                 observation_noise=False):
        if X is None:
            return gp_prior(x_test, cov=cov, l=self.l)
        assert y is not None
        return gp_posterior(X, y, x_test, cov=cov, l=self.l,
                            sigma_y=self.sigma_y,
                            observation_noise=observation_noise)

    def log_marginal_likelihood(self, X, y, cov='se'):
        n = X.shape[0]
        K = covariance_matrix(X, X, cov=cov, l=self.l)
        d = jnp.arange(n)
        K = K.at[d, d].add(1e-8 + self.sigma_y ** 2)
        chol = jnp.linalg.cholesky(K)
        alpha = jax.scipy.linalg.cho_solve((chol, True), y.astype(jnp.float32))
        a = -0.5 * jnp.dot(y.astype(jnp.float32), alpha)
        b = -jnp.sum(jnp.log(jnp.diagonal(chol)))
        c = -n / 2.0 * jnp.log(2.0 * jnp.pi)
        return a + b + c


# ------------------------------ reference check --------------------------------

def _cov_ref(x1, x2, l, jitter=0.0):
    d = jnp.abs(x1[:, None] - x2[None, :]) / l
    K = jnp.exp(-0.5 * d * d)
    if x1.shape[0] == x2.shape[0] and jitter != 0.0:
        K = K + jitter * jnp.eye(x1.shape[0], dtype=jnp.float32)
    return K


def _posterior_ref(X, y, x_test, sigma_y, l):
    K_nn = _cov_ref(X, X, l, sigma_y ** 2 + 1e-8)
    inv = jnp.linalg.inv(K_nn)
    K_tn = _cov_ref(x_test, X, l)
    K_tt = _cov_ref(x_test, x_test, l, 1e-8)
    mu = K_tn @ inv @ y
    covar = K_tt - K_tn @ inv @ K_tn.T
    return mu, covar


if __name__ == "__main__":
    key = jax.random.PRNGKey(0)
    k1, k2, k3, k4 = jax.random.split(key, 4)

    # ---- small case: posterior, prior, Matern branch ----
    N, T = 8, 16
    X = jnp.sort(jax.random.uniform(k1, (N,), jnp.float32, -3.0, 3.0))
    y = jnp.sin(X) + 0.05 * jax.random.normal(k2, (N,), jnp.float32)
    x_test = jnp.linspace(-3.0, 3.0, T, dtype=jnp.float32)

    gp = GP(sigma_y=0.1, l=1.0)

    mu, covar = gp(x_test, X, y, cov='se')
    mu = jax.block_until_ready(mu)
    covar = jax.block_until_ready(covar)

    loc_p, K_p = gp(x_test, cov='se')
    jax.block_until_ready(K_p)

    mu_m, covar_m = gp(x_test, X, y, cov='mat2.5', observation_noise=True)
    jax.block_until_ready(covar_m)
    assert bool(jnp.all(jnp.isfinite(mu_m))) and bool(jnp.all(jnp.isfinite(covar_m)))

    mu_ref, covar_ref = _posterior_ref(X, y, x_test, gp.sigma_y, gp.l)
    assert mu.shape == (T,) and covar.shape == (T, T)
    assert jnp.allclose(mu, mu_ref, atol=1e-4, rtol=1e-4)
    assert jnp.allclose(covar, covar_ref, atol=1e-4, rtol=1e-4)
    assert loc_p.shape == (T,) and K_p.shape == (T, T)

    # ---- multi-tile grid path: tile < t forces 2 parallel grid steps ----
    N2, T2 = 32, 256
    X2 = jnp.sort(jax.random.uniform(k3, (N2,), jnp.float32, -3.0, 3.0))
    y2 = jnp.sin(X2) + 0.05 * jax.random.normal(k4, (N2,), jnp.float32)
    xt2 = jnp.linspace(-3.0, 3.0, T2, dtype=jnp.float32)
    mu2, covar2 = gp_posterior(X2, y2, xt2, cov='se', sigma_y=0.1, l=1.0,
                               test_tile=128)
    mu2 = jax.block_until_ready(mu2)
    covar2 = jax.block_until_ready(covar2)
    mu2_ref, covar2_ref = _posterior_ref(X2, y2, xt2, jnp.float32(0.1), 1.0)
    assert jnp.allclose(mu2, mu2_ref, atol=1e-4, rtol=1e-4)
    assert jnp.allclose(covar2, covar2_ref, atol=1e-4, rtol=1e-4)

    print("KERNEL_OK")
</pallas_src>

<mosaic_0001>
module attributes {stable_mosaic.version = 11 : i64} {
  func.func @_cov_matrix_kernel(%arg0: i32, %arg1: memref<8x1xf32, #tpu.memory_space<vmem>>, %arg2: memref<1x8xf32, #tpu.memory_space<vmem>>, %arg3: memref<8x8xf32, #tpu.memory_space<vmem>>) attributes {dimension_semantics = [#tpu.dimension_semantics<parallel>], iteration_bounds = array<i64: 1>, scalar_prefetch = 0 : i64, scratch_operands = 0 : i64, tpu.core_type = #tpu.core_type<tc>, window_params = [{transform_indices = @transform_0, window_bounds = array<i64: 8, 1>}, {pipeline_mode = #tpu.pipeline_mode<synchronous>, transform_indices = @transform_1, window_bounds = array<i64: 1, 8>}, {transform_indices = @transform_2, window_bounds = array<i64: 8, 8>}]} {
    %c0 = arith.constant 0 : index
    %c0_0 = arith.constant 0 : index
    %0 = vector.load %arg1[%c0, %c0_0] : memref<8x1xf32, #tpu.memory_space<vmem>>, vector<8x1xf32>
    %c0_1 = arith.constant 0 : index
    %c0_2 = arith.constant 0 : index
    %1 = vector.load %arg2[%c0_1, %c0_2] : memref<1x8xf32, #tpu.memory_space<vmem>>, vector<1x8xf32>
    %2 = vector.broadcast %0 : vector<8x1xf32> to vector<8x8xf32>
    %3 = vector.broadcast %1 : vector<1x8xf32> to vector<8x8xf32>
    %4 = arith.subf %2, %3 : vector<8x8xf32>
    %cst = arith.constant -5.000000e-01 : f32
    %5 = vector.broadcast %cst : f32 to vector<8x8xf32>
    %6 = arith.mulf %5, %4 : vector<8x8xf32>
    %7 = arith.mulf %6, %4 : vector<8x8xf32>
    %8 = math.exp %7 : vector<8x8xf32>
    %c0_3 = arith.constant 0 : index
    %c0_4 = arith.constant 0 : index
    %9 = vector.load %arg3[%c0_3, %c0_4] : memref<8x8xf32, #tpu.memory_space<vmem>>, vector<8x8xf32>
    tpu.vector_store %arg3[%c0_3, %c0_4], %8 {strides = array<i32>} : memref<8x8xf32, #tpu.memory_space<vmem>>, vector<8x8xf32>,
    return
  }
  func.func @transform_0(%arg0: i32) -> (i32, i32) {
    %c0_i32 = arith.constant 0 : i32
    %c0_i32_0 = arith.constant 0 : i32
    return %arg0, %c0_i32 : i32, i32
  }
  func.func @transform_1(%arg0: i32) -> (i32, i32) {
    %c0_i32 = arith.constant 0 : i32
    %c0_i32_0 = arith.constant 0 : i32
    %c0_i32_1 = arith.constant 0 : i32
    return %c0_i32, %c0_i32_0 : i32, i32
  }
  func.func @transform_2(%arg0: i32) -> (i32, i32) {
    %c0_i32 = arith.constant 0 : i32
    %c0_i32_0 = arith.constant 0 : i32
    return %arg0, %c0_i32 : i32, i32
  }
}

</mosaic_0001>

<llo_original>
// kernel: tpu_custom_call.1
$region0: #{tpu_custom_call.1}
  #allocation0 [shape = 'u32[]', space=smem, size = 0x4, offset = 0x4, fixed_abs, tag = 'smem constant byte address 0x4 - core index']
  #allocation1 [shape = 'u32[144,128]{1,0:T(1,128)}', space=vmem, size = 0x12000, scoped, tag = 'internal scratch']
  %s0 = inlined_call_operand.vmem [shape: f32[8,1], index: 0, kind: input, shape index: {}]
  %s1 = inlined_call_operand.vmem [shape: f32[1,8], index: 1, kind: input, shape index: {}]
  %s2 = inlined_call_operand.hbm [shape: f32[8,8], index: 2, kind: output, shape index: {}]
  %s3 = sld [smem:[#allocation0]]
  $region18: #{tpu_custom_call.1} parent=0
    _
  %s5 = ssub.s32 1, %s3
  %s6 = scalar_select 0, %s5, %s3
  $region1: #{tpu_custom_call.1} parent=0
    #allocation2 [shape = 'u8[4096]{0}', space=vmem, size = 0x1000, scoped, tag = 'output window, operand 0, single buffered']
    #allocation3 [shape = 's32[1]{0}', space=sflag, size = 0x4, scoped, tag = 'scoped memory for tpu_custom_call.1']
    %7 = vsyncpa [#allocation3], 0
    // Predicated region
    $region2: #{tpu_custom_call.1} parent=1 // pred_check
      _
    $region3: #{tpu_custom_call.1} parent=1 // pred_check_branch
      %9 = sbr.rel (0) target = $region5
    $region4: #{tpu_custom_call.1} parent=1 // pred_region
      _
    $region5: #{tpu_custom_call.1} parent=1 // pred_fallthru
      _
    // Predicated region
    $region6: #{tpu_custom_call.1} parent=1 // pred_check
      _
    $region7: #{tpu_custom_call.1} parent=1 // pred_check_branch
      %11 = sbr.rel (0) target = $region9
    $region8: #{tpu_custom_call.1} parent=1 // pred_region
      _
    $region9: #{tpu_custom_call.1} parent=1 // pred_fallthru
      _
    %v12 = vld [vmem:[%s0] sm:$0xff]
    %v13 = vld [vmem:[%s1] sm:$0x1]
    %15 = vset.pattern.permute.xlu0 0
    %16 = vperm.xlu0 %15, %v12
    %v17 = vpop.permute.xlu0 %16
    %v20 = vlaneseq
    %v21 = vshrl.u32 %v20, 7
    %v22 = vsub.s32 0, %v21
    %v23 = vrot.slane %v13, %v22
    %v25 = vsub.f32 %v17, %v23
    %v26 = vmul.f32 %v25, -0.5
    %v27 = vmul.f32 %v26, %v25
    %v28 = vmul.f32 %v27, 1.442695
    %v29 = vpow.pop %v28
    %vm30 = vcmask 64512
    %31 = vst.msk [vmem:[#allocation2] sm:$0xff] %vm30, %v29
    // Predicated region
    $region10: #{tpu_custom_call.1} parent=1 // pred_check
      _
    $region11: #{tpu_custom_call.1} parent=1 // pred_check_branch
      %33 = sbr.rel (0) target = $region13
    $region12: #{tpu_custom_call.1} parent=1 // pred_region
      %s35 = ssub.s32 128, 128
      %36 = vsyncadd [#allocation3], %s35
      %s38 = sshll.u32 [#allocation2], 4
      %s39 = int_to_ptr.vmem [resolvable:$true] %s38
      %41 = dma.vmem_to_hbm [thread:$0]  %s39, 128, %s2, [#allocation3]
    $region13: #{tpu_custom_call.1} parent=1 // pred_fallthru
      _
    // Predicated region
    $region14: #{tpu_custom_call.1} parent=1 // pred_check
      _
    $region15: #{tpu_custom_call.1} parent=1 // pred_check_branch
      %43 = sbr.rel (0) target = $region17
    $region16: #{tpu_custom_call.1} parent=1 // pred_region
      %44 = dma.done [#allocation3], 128
    $region17: #{tpu_custom_call.1} parent=1 // pred_fallthru
      _
    %45 = vsyncpa [#allocation3], 1

</llo_original>
